<compile_context>
chip_gen: v5e
topology: v5e:2x2
jax: 0.10.0
libtpu: 0.0.40
codegen_flags: <defaults>
</compile_context>

<pallas_src>
import functools

import jax
import jax.numpy as jnp
from jax.experimental import pallas as pl
from jax.experimental.pallas import tpu as pltpu


def _round_up(x, m):
    return ((x + m - 1) // m) * m


def _actor_kernel(x_ref, w1_ref, w2_ref, w3_ref, b_ref, o_ref, *, hp, op):
    # One fused MLP block per batch tile; all operands resident in VMEM.
    x = x_ref[...]

    # Static (lane-aligned) slices of the concatenated bias vector.
    b1 = b_ref[:, 0:hp]
    b2 = b_ref[:, hp:2 * hp]
    b3 = b_ref[:, 2 * hp:2 * hp + op]

    # fc1 + relu
    h1 = jnp.dot(x, w1_ref[...], preferred_element_type=jnp.float32) + b1
    h1 = jnp.maximum(h1, 0.0)

    # fc2 + relu
    h2 = jnp.dot(h1, w2_ref[...], preferred_element_type=jnp.float32) + b2
    h2 = jnp.maximum(h2, 0.0)

    # fc3 + tanh, scaled by 2 (max_action = 2)
    h3 = jnp.dot(h2, w3_ref[...], preferred_element_type=jnp.float32) + b3
    o_ref[...] = (2.0 * jnp.tanh(h3)).astype(o_ref.dtype)


def actor_forward(x, params, *, tile_b=256):
    """x: (B, input_size) float32.  params: dict of w1,b1,w2,b2,w3,b3.

    Weights are (in_features, out_features); biases are (1, out_features).
    """
    w1, b1, w2, b2, w3, b3 = (params[k] for k in ("w1", "b1", "w2", "b2", "w3", "b3"))
    B, in_size = x.shape
    hidden = w1.shape[1]
    out_size = w3.shape[1]

    # --- lane-align all feature dims (zero padding is exact for this MLP) ---
    ip = _round_up(in_size, 128)
    hp = _round_up(hidden, 128)
    op = _round_up(out_size, 128)

    w1p = jnp.zeros((ip, hp), jnp.float32).at[:in_size, :hidden].set(w1)
    w2p = jnp.zeros((hp, hp), jnp.float32).at[:hidden, :hidden].set(w2)
    w3p = jnp.zeros((hp, op), jnp.float32).at[:hidden, :out_size].set(w3)

    # Concatenate the three biases into a single lane-aligned row (1 DMA).
    b_all = jnp.zeros((1, 2 * hp + op), jnp.float32)
    b_all = b_all.at[:, 0:hidden].set(b1.reshape(1, -1))
    b_all = b_all.at[:, hp:hp + hidden].set(b2.reshape(1, -1))
    b_all = b_all.at[:, 2 * hp:2 * hp + out_size].set(b3.reshape(1, -1))

    # --- batch tiling (sized well under v7x's 64 MiB VMEM with f32 tiles) ---
    tile_b = min(tile_b, _round_up(B, 8))
    bp = _round_up(B, tile_b)
    xp = jnp.zeros((bp, ip), jnp.float32).at[:B, :in_size].set(x)

    grid = (bp // tile_b,)
    kernel = functools.partial(_actor_kernel, hp=hp, op=op)

    out = pl.pallas_call(
        kernel,
        out_shape=jax.ShapeDtypeStruct((bp, op), jnp.float32),
        grid=grid,
        in_specs=[
            pl.BlockSpec((tile_b, ip), lambda i: (i, 0)),      # x: streamed per tile
            pl.BlockSpec((ip, hp), lambda i: (0, 0)),          # weights stay resident
            pl.BlockSpec((hp, hp), lambda i: (0, 0)),
            pl.BlockSpec((hp, op), lambda i: (0, 0)),
            pl.BlockSpec((1, 2 * hp + op), lambda i: (0, 0)),  # fused biases
        ],
        out_specs=pl.BlockSpec((tile_b, op), lambda i: (i, 0)),
        compiler_params=pltpu.CompilerParams(
            dimension_semantics=("parallel",),
        ),
    )(xp, w1p, w2p, w3p, b_all)

    return out[:B, :out_size]


def init_actor_params(key, input_size, hidden, output_size):
    """Deterministic init mimicking torch.nn.Linear default (U(-1/sqrt(fan_in), +))."""
    ks = jax.random.split(key, 6)

    def linear(kw, kb, fan_in, fan_out):
        bound = 1.0 / jnp.sqrt(fan_in)
        # stored as (in_features, out_features) == W.T relative to PyTorch
        w = jax.random.uniform(kw, (fan_in, fan_out), jnp.float32, -bound, bound)
        b = jax.random.uniform(kb, (1, fan_out), jnp.float32, -bound, bound)
        return w, b

    w1, b1 = linear(ks[0], ks[1], input_size, hidden)
    w2, b2 = linear(ks[2], ks[3], hidden, hidden)
    w3, b3 = linear(ks[4], ks[5], hidden, output_size)
    return {"w1": w1, "b1": b1, "w2": w2, "b2": b2, "w3": w3, "b3": b3}


def actor_reference(x, p):
    h1 = jnp.maximum(x @ p["w1"] + p["b1"], 0.0)
    h2 = jnp.maximum(h1 @ p["w2"] + p["b2"], 0.0)
    return 2.0 * jnp.tanh(h2 @ p["w3"] + p["b3"])


if __name__ == "__main__":
    key = jax.random.PRNGKey(0)
    k_x, k_p = jax.random.split(key)

    batch, input_size, hidden, output_size = 8, 16, 32, 4
    x = jax.random.normal(k_x, (batch, input_size), jnp.float32)
    params = init_actor_params(k_p, input_size, hidden, output_size)

    out = actor_forward(x, params)
    out = jax.block_until_ready(out)

    ref = actor_reference(x, params)
    assert out.shape == (batch, output_size)
    assert jnp.allclose(out, ref, atol=1e-5, rtol=1e-5), "mismatch vs reference"

    # Also exercise a multi-block grid (batch > tile) to check the tiling path.
    k_x2, _ = jax.random.split(k_x)
    x_big = jax.random.normal(k_x2, (300, input_size), jnp.float32)
    out_big = jax.block_until_ready(actor_forward(x_big, params, tile_b=128))
    ref_big = actor_reference(x_big, params)
    assert out_big.shape == (300, output_size)
    assert jnp.allclose(out_big, ref_big, atol=1e-5, rtol=1e-5), "mismatch (tiled)"

    print("KERNEL_OK")
</pallas_src>

<mosaic_0001>
module attributes {stable_mosaic.version = 11 : i64} {
  func.func @_actor_kernel(%arg0: i32, %arg1: memref<8x128xf32, #tpu.memory_space<vmem>>, %arg2: memref<128x128xf32, #tpu.memory_space<vmem>>, %arg3: memref<128x128xf32, #tpu.memory_space<vmem>>, %arg4: memref<128x128xf32, #tpu.memory_space<vmem>>, %arg5: memref<1x384xf32, #tpu.memory_space<vmem>>, %arg6: memref<8x128xf32, #tpu.memory_space<vmem>>) attributes {dimension_semantics = [#tpu.dimension_semantics<parallel>], iteration_bounds = array<i64: 1>, scalar_prefetch = 0 : i64, scratch_operands = 0 : i64, tpu.core_type = #tpu.core_type<tc>, window_params = [{transform_indices = @transform_0, window_bounds = array<i64: 8, 128>}, {pipeline_mode = #tpu.pipeline_mode<synchronous>, transform_indices = @transform_1, window_bounds = array<i64: 128, 128>}, {pipeline_mode = #tpu.pipeline_mode<synchronous>, transform_indices = @transform_2, window_bounds = array<i64: 128, 128>}, {pipeline_mode = #tpu.pipeline_mode<synchronous>, transform_indices = @transform_3, window_bounds = array<i64: 128, 128>}, {pipeline_mode = #tpu.pipeline_mode<synchronous>, transform_indices = @transform_4, window_bounds = array<i64: 1, 384>}, {transform_indices = @transform_5, window_bounds = array<i64: 8, 128>}]} {
    %c0 = arith.constant 0 : index
    %c0_0 = arith.constant 0 : index
    %0 = vector.load %arg1[%c0, %c0_0] : memref<8x128xf32, #tpu.memory_space<vmem>>, vector<8x128xf32>
    %c0_1 = arith.constant 0 : index
    %c0_2 = arith.constant 0 : index
    %1 = vector.load %arg5[%c0_1, %c0_2] : memref<1x384xf32, #tpu.memory_space<vmem>>, vector<1x128xf32>
    %c0_3 = arith.constant 0 : index
    %c128 = arith.constant 128 : index
    %2 = vector.load %arg5[%c0_3, %c128] : memref<1x384xf32, #tpu.memory_space<vmem>>, vector<1x128xf32>
    %c0_4 = arith.constant 0 : index
    %c256 = arith.constant 256 : index
    %3 = vector.load %arg5[%c0_4, %c256] : memref<1x384xf32, #tpu.memory_space<vmem>>, vector<1x128xf32>
    %c0_5 = arith.constant 0 : index
    %c0_6 = arith.constant 0 : index
    %4 = vector.load %arg2[%c0_5, %c0_6] : memref<128x128xf32, #tpu.memory_space<vmem>>, vector<128x128xf32>
    %cst = arith.constant dense<0.000000e+00> : vector<8x128xf32>
    %5 = tpu.matmul %0, %4, %cst {dimension_numbers = #tpu.dot_dimension_numbers<[1], [0], [0], [1], [0, 0, 1, 1], [], []>} : vector<8x128xf32>, vector<128x128xf32>, vector<8x128xf32> -> vector<8x128xf32>
    %6 = vector.broadcast %1 : vector<1x128xf32> to vector<8x128xf32>
    %7 = arith.addf %5, %6 : vector<8x128xf32>
    %cst_7 = arith.constant 0.000000e+00 : f32
    %8 = vector.broadcast %cst_7 : f32 to vector<8x128xf32>
    %9 = arith.maximumf %7, %8 : vector<8x128xf32>
    %c0_8 = arith.constant 0 : index
    %c0_9 = arith.constant 0 : index
    %10 = vector.load %arg3[%c0_8, %c0_9] : memref<128x128xf32, #tpu.memory_space<vmem>>, vector<128x128xf32>
    %cst_10 = arith.constant dense<0.000000e+00> : vector<8x128xf32>
    %11 = tpu.matmul %9, %10, %cst_10 {dimension_numbers = #tpu.dot_dimension_numbers<[1], [0], [0], [1], [0, 0, 1, 1], [], []>} : vector<8x128xf32>, vector<128x128xf32>, vector<8x128xf32> -> vector<8x128xf32>
    %12 = vector.broadcast %2 : vector<1x128xf32> to vector<8x128xf32>
    %13 = arith.addf %11, %12 : vector<8x128xf32>
    %cst_11 = arith.constant 0.000000e+00 : f32
    %14 = vector.broadcast %cst_11 : f32 to vector<8x128xf32>
    %15 = arith.maximumf %13, %14 : vector<8x128xf32>
    %c0_12 = arith.constant 0 : index
    %c0_13 = arith.constant 0 : index
    %16 = vector.load %arg4[%c0_12, %c0_13] : memref<128x128xf32, #tpu.memory_space<vmem>>, vector<128x128xf32>
    %cst_14 = arith.constant dense<0.000000e+00> : vector<8x128xf32>
    %17 = tpu.matmul %15, %16, %cst_14 {dimension_numbers = #tpu.dot_dimension_numbers<[1], [0], [0], [1], [0, 0, 1, 1], [], []>} : vector<8x128xf32>, vector<128x128xf32>, vector<8x128xf32> -> vector<8x128xf32>
    %18 = vector.broadcast %3 : vector<1x128xf32> to vector<8x128xf32>
    %19 = arith.addf %17, %18 : vector<8x128xf32>
    %20 = math.tanh %19 : vector<8x128xf32>
    %cst_15 = arith.constant 2.000000e+00 : f32
    %21 = vector.broadcast %cst_15 : f32 to vector<8x128xf32>
    %22 = arith.mulf %21, %20 : vector<8x128xf32>
    %c0_16 = arith.constant 0 : index
    %c0_17 = arith.constant 0 : index
    %23 = vector.load %arg6[%c0_16, %c0_17] : memref<8x128xf32, #tpu.memory_space<vmem>>, vector<8x128xf32>
    tpu.vector_store %arg6[%c0_16, %c0_17], %22 {strides = array<i32>} : memref<8x128xf32, #tpu.memory_space<vmem>>, vector<8x128xf32>,
    return
  }
  func.func @transform_0(%arg0: i32) -> (i32, i32) {
    %c0_i32 = arith.constant 0 : i32
    %c0_i32_0 = arith.constant 0 : i32
    return %arg0, %c0_i32 : i32, i32
  }
  func.func @transform_1(%arg0: i32) -> (i32, i32) {
    %c0_i32 = arith.constant 0 : i32
    %c0_i32_0 = arith.constant 0 : i32
    %c0_i32_1 = arith.constant 0 : i32
    return %c0_i32, %c0_i32_0 : i32, i32
  }
  func.func @transform_2(%arg0: i32) -> (i32, i32) {
    %c0_i32 = arith.constant 0 : i32
    %c0_i32_0 = arith.constant 0 : i32
    %c0_i32_1 = arith.constant 0 : i32
    return %c0_i32, %c0_i32_0 : i32, i32
  }
  func.func @transform_3(%arg0: i32) -> (i32, i32) {
    %c0_i32 = arith.constant 0 : i32
    %c0_i32_0 = arith.constant 0 : i32
    %c0_i32_1 = arith.constant 0 : i32
    return %c0_i32, %c0_i32_0 : i32, i32
  }
  func.func @transform_4(%arg0: i32) -> (i32, i32) {
    %c0_i32 = arith.constant 0 : i32
    %c0_i32_0 = arith.constant 0 : i32
    %c0_i32_1 = arith.constant 0 : i32
    return %c0_i32, %c0_i32_0 : i32, i32
  }
  func.func @transform_5(%arg0: i32) -> (i32, i32) {
    %c0_i32 = arith.constant 0 : i32
    %c0_i32_0 = arith.constant 0 : i32
    return %arg0, %c0_i32 : i32, i32
  }
}

</mosaic_0001>

<llo_original>
// kernel: tpu_custom_call.1
$region0: #{tpu_custom_call.1}
  #allocation0 [shape = 'u32[]', space=smem, size = 0x4, offset = 0x4, fixed_abs, tag = 'smem constant byte address 0x4 - core index']
  #allocation1 [shape = 'u32[72,128]{1,0:T(1,128)}', space=vmem, size = 0x9000, scoped, tag = 'internal scratch']
  %s0 = inlined_call_operand.hbm [shape: f32[8,128], index: 0, kind: input, shape index: {}]
  %s1 = inlined_call_operand.hbm [shape: f32[128,128], index: 1, kind: input, shape index: {}]
  %s2 = inlined_call_operand.hbm [shape: f32[128,128], index: 2, kind: input, shape index: {}]
  %s3 = inlined_call_operand.hbm [shape: f32[128,128], index: 3, kind: input, shape index: {}]
  %s4 = inlined_call_operand.vmem [shape: f32[1,384], index: 4, kind: input, shape index: {}]
  %s5 = inlined_call_operand.hbm [shape: f32[8,128], index: 5, kind: output, shape index: {}]
  %s6 = sld [smem:[#allocation0]]
  $region46: #{tpu_custom_call.1} parent=0
    _
  %s8 = ssub.s32 1, %s6
  %s9 = scalar_select 0, %s8, %s6
  $region1: #{tpu_custom_call.1} parent=0
    #allocation2 [shape = 'u8[4096]{0}', space=vmem, size = 0x1000, scoped, tag = 'input window, operand 0, single buffered']
    #allocation3 [shape = 's32[1]{0}', space=sflag, size = 0x4, scoped, tag = 'scoped memory for tpu_custom_call.1']
    #allocation4 [shape = 's32[1]{0}', space=sflag, size = 0x4, scoped, tag = 'scoped memory for tpu_custom_call.1']
    #allocation5 [shape = 'u8[65536]{0}', space=vmem, size = 0x10000, scoped, tag = 'input window, operand 1, single buffered']
    #allocation6 [shape = 's32[1]{0}', space=sflag, size = 0x4, scoped, tag = 'scoped memory for tpu_custom_call.1']
    #allocation7 [shape = 'u8[65536]{0}', space=vmem, size = 0x10000, scoped, tag = 'input window, operand 2, single buffered']
    #allocation8 [shape = 'u8[65536]{0}', space=vmem, size = 0x10000, scoped, tag = 'input window, operand 3, single buffered']
    #allocation9 [shape = 's32[1]{0}', space=sflag, size = 0x4, scoped, tag = 'scoped memory for tpu_custom_call.1']
    #allocation10 [shape = 'u8[4096]{0}', space=vmem, size = 0x1000, scoped, tag = 'output window, operand 0, single buffered']
    %10 = vsyncpa [#allocation3], 0
    %11 = vsyncpa [#allocation6], 0
    %12 = vsyncpa [#allocation9], 0
    %13 = vsyncpa [#allocation4], 0
    // Predicated region
    $region2: #{tpu_custom_call.1} parent=1 // pred_check
      _
    $region3: #{tpu_custom_call.1} parent=1 // pred_check_branch
      %15 = sbr.rel (0) target = $region5
    $region4: #{tpu_custom_call.1} parent=1 // pred_region
      %17 = vsyncadd [#allocation3], 0
      %s19 = sshll.u32 %s0, 4
      %s20 = int_to_ptr.hbm [resolvable:$true] %s19
      %s21 = sshll.u32 [#allocation2], 4
      %s22 = int_to_ptr.vmem [resolvable:$true] %s21
      %24 = dma.hbm_to_vmem [thread:$0]  %s20, 128, %s22, [#allocation3]
    $region5: #{tpu_custom_call.1} parent=1 // pred_fallthru
      _
    // Predicated region
    $region6: #{tpu_custom_call.1} parent=1 // pred_check
      _
    $region7: #{tpu_custom_call.1} parent=1 // pred_check_branch
      %26 = sbr.rel (0) target = $region9
    $region8: #{tpu_custom_call.1} parent=1 // pred_region
      %28 = vsyncadd [#allocation6], 0
      %s29 = sshll.u32 %s1, 4
      %s30 = int_to_ptr.hbm [resolvable:$true] %s29
      %s31 = sshll.u32 [#allocation5], 4
      %s32 = int_to_ptr.vmem [resolvable:$true] %s31
      %37 = dma.hbm_to_vmem [thread:$0]  %s30, 2048, %s32, [#allocation6], 128, 128, 8
    $region9: #{tpu_custom_call.1} parent=1 // pred_fallthru
      _
    // Predicated region
    $region10: #{tpu_custom_call.1} parent=1 // pred_check
      _
    $region11: #{tpu_custom_call.1} parent=1 // pred_check_branch
      %39 = sbr.rel (0) target = $region13
    $region12: #{tpu_custom_call.1} parent=1 // pred_region
      %41 = vsyncadd [#allocation6], 0
      %s42 = sshll.u32 %s2, 4
      %s43 = int_to_ptr.hbm [resolvable:$true] %s42
      %s44 = sshll.u32 [#allocation7], 4
      %s45 = int_to_ptr.vmem [resolvable:$true] %s44
      %50 = dma.hbm_to_vmem [thread:$0]  %s43, 2048, %s45, [#allocation6], 128, 128, 8
    $region13: #{tpu_custom_call.1} parent=1 // pred_fallthru
      _
    // Predicated region
    $region14: #{tpu_custom_call.1} parent=1 // pred_check
      _
    $region15: #{tpu_custom_call.1} parent=1 // pred_check_branch
      %52 = sbr.rel (0) target = $region17
    $region16: #{tpu_custom_call.1} parent=1 // pred_region
      %54 = vsyncadd [#allocation9], 0
      %s55 = sshll.u32 %s3, 4
      %s56 = int_to_ptr.hbm [resolvable:$true] %s55
      %s57 = sshll.u32 [#allocation8], 4
      %s58 = int_to_ptr.vmem [resolvable:$true] %s57
      %63 = dma.hbm_to_vmem [thread:$0]  %s56, 2048, %s58, [#allocation9], 128, 128, 8
    $region17: #{tpu_custom_call.1} parent=1 // pred_fallthru
      _
    // Predicated region
    $region18: #{tpu_custom_call.1} parent=1 // pred_check
      _
    $region19: #{tpu_custom_call.1} parent=1 // pred_check_branch
      %65 = sbr.rel (0) target = $region21
    $region20: #{tpu_custom_call.1} parent=1 // pred_region
      _
    $region21: #{tpu_custom_call.1} parent=1 // pred_fallthru
      _
    // Predicated region
    $region22: #{tpu_custom_call.1} parent=1 // pred_check
      _
    $region23: #{tpu_custom_call.1} parent=1 // pred_check_branch
      %67 = sbr.rel (0) target = $region25
    $region24: #{tpu_custom_call.1} parent=1 // pred_region
      %69 = dma.done [#allocation3], 128
    $region25: #{tpu_custom_call.1} parent=1 // pred_fallthru
      _
    // Predicated region
    $region26: #{tpu_custom_call.1} parent=1 // pred_check
      _
    $region27: #{tpu_custom_call.1} parent=1 // pred_check_branch
      %71 = sbr.rel (0) target = $region29
    $region28: #{tpu_custom_call.1} parent=1 // pred_region
      %73 = dma.done [#allocation6], 2048
    $region29: #{tpu_custom_call.1} parent=1 // pred_fallthru
      _
    // Predicated region
    $region30: #{tpu_custom_call.1} parent=1 // pred_check
      _
    $region31: #{tpu_custom_call.1} parent=1 // pred_check_branch
      %75 = sbr.rel (0) target = $region33
    $region32: #{tpu_custom_call.1} parent=1 // pred_region
      %77 = dma.done [#allocation6], 2048
    $region33: #{tpu_custom_call.1} parent=1 // pred_fallthru
      _
    // Predicated region
    $region34: #{tpu_custom_call.1} parent=1 // pred_check
      _
    $region35: #{tpu_custom_call.1} parent=1 // pred_check_branch
      %79 = sbr.rel (0) target = $region37
    $region36: #{tpu_custom_call.1} parent=1 // pred_region
      %81 = dma.done [#allocation9], 2048
    $region37: #{tpu_custom_call.1} parent=1 // pred_fallthru
      _
    %v82 = vld [vmem:[#allocation2] sm:$0xff]
    %v83 = vld [vmem:[%s4] sm:$0x1]
    %v84 = vld [vmem:[%s4 + $0x1] sm:$0x1]
    %v85 = vld [vmem:[%s4 + $0x2] sm:$0x1]
    %v86 = vld [vmem:[#allocation5] sm:$0xff]
    %v87 = vld [vmem:[#allocation5 + $0x8] sm:$0xff]
    %v88 = vld [vmem:[#allocation5 + $0x10] sm:$0xff]
    %v89 = vld [vmem:[#allocation5 + $0x18] sm:$0xff]
    %v90 = vld [vmem:[#allocation5 + $0x20] sm:$0xff]
    %v91 = vld [vmem:[#allocation5 + $0x28] sm:$0xff]
    %v92 = vld [vmem:[#allocation5 + $0x30] sm:$0xff]
    %v93 = vld [vmem:[#allocation5 + $0x38] sm:$0xff]
    %v94 = vld [vmem:[#allocation5 + $0x40] sm:$0xff]
    %v95 = vld [vmem:[#allocation5 + $0x48] sm:$0xff]
    %v96 = vld [vmem:[#allocation5 + $0x50] sm:$0xff]
    %v97 = vld [vmem:[#allocation5 + $0x58] sm:$0xff]
    %v98 = vld [vmem:[#allocation5 + $0x60] sm:$0xff]
    %v99 = vld [vmem:[#allocation5 + $0x68] sm:$0xff]
    %v100 = vld [vmem:[#allocation5 + $0x70] sm:$0xff]
    %v101 = vld [vmem:[#allocation5 + $0x78] sm:$0xff]
    %v103 = vperm.slane %v83, 0
    %105 = vmatpush.msra.mxu0 %v101
    %106 = vmatpush.msra.mxu0 %v100
    %107 = vmatpush.msra.mxu0 %v99
    %108 = vmatpush.msra.mxu0 %v98
    %109 = vmatpush.msra.mxu0 %v97
    %110 = vmatpush.msra.mxu0 %v96
    %111 = vmatpush.msra.mxu0 %v95
    %112 = vmatpush.msra.mxu0 %v94
    %113 = vmatpush.msra.mxu0 %v93
    %114 = vmatpush.msra.mxu0 %v92
    %115 = vmatpush.msra.mxu0 %v91
    %116 = vmatpush.msra.mxu0 %v90
    %117 = vmatpush.msra.mxu0 %v89
    %118 = vmatpush.msra.mxu0 %v88
    %119 = vmatpush.msra.mxu0 %v87
    %120 = vmatpush.msra.mxu0 %v86
    %121 = vmatmul.f32.gmra.mxu0 %v82
    %v122 = vpop.f32.mrf.mxu0
    %v123 = vadd.f32 %v103, %v122
    %124 = vdwg.mxu0
    %v125 = vmax.f32 %v123, 0.0
    %v126 = vld [vmem:[#allocation7] sm:$0xff]
    %v127 = vld [vmem:[#allocation7 + $0x8] sm:$0xff]
    %v128 = vld [vmem:[#allocation7 + $0x10] sm:$0xff]
    %v129 = vld [vmem:[#allocation7 + $0x18] sm:$0xff]
    %v130 = vld [vmem:[#allocation7 + $0x20] sm:$0xff]
    %v131 = vld [vmem:[#allocation7 + $0x28] sm:$0xff]
    %v132 = vld [vmem:[#allocation7 + $0x30] sm:$0xff]
    %v133 = vld [vmem:[#allocation7 + $0x38] sm:$0xff]
    %v134 = vld [vmem:[#allocation7 + $0x40] sm:$0xff]
    %v135 = vld [vmem:[#allocation7 + $0x48] sm:$0xff]
    %v136 = vld [vmem:[#allocation7 + $0x50] sm:$0xff]
    %v137 = vld [vmem:[#allocation7 + $0x58] sm:$0xff]
    %v138 = vld [vmem:[#allocation7 + $0x60] sm:$0xff]
    %v139 = vld [vmem:[#allocation7 + $0x68] sm:$0xff]
    %v140 = vld [vmem:[#allocation7 + $0x70] sm:$0xff]
    %v141 = vld [vmem:[#allocation7 + $0x78] sm:$0xff]
    %v143 = vperm.slane %v84, 0
    %145 = vmatpush.msra.mxu0 %v141
    %146 = vmatpush.msra.mxu0 %v140
    %147 = vmatpush.msra.mxu0 %v139
    %148 = vmatpush.msra.mxu0 %v138
    %149 = vmatpush.msra.mxu0 %v137
    %150 = vmatpush.msra.mxu0 %v136
    %151 = vmatpush.msra.mxu0 %v135
    %152 = vmatpush.msra.mxu0 %v134
    %153 = vmatpush.msra.mxu0 %v133
    %154 = vmatpush.msra.mxu0 %v132
    %155 = vmatpush.msra.mxu0 %v131
    %156 = vmatpush.msra.mxu0 %v130
    %157 = vmatpush.msra.mxu0 %v129
    %158 = vmatpush.msra.mxu0 %v128
    %159 = vmatpush.msra.mxu0 %v127
    %160 = vmatpush.msra.mxu0 %v126
    %161 = vmatmul.f32.gmra.mxu0 %v125
    %v162 = vpop.f32.mrf.mxu0
    %v163 = vadd.f32 %v143, %v162
    %164 = vdwg.mxu0
    %v165 = vmax.f32 %v163, 0.0
    %v166 = vld [vmem:[#allocation8] sm:$0xff]
    %v167 = vld [vmem:[#allocation8 + $0x8] sm:$0xff]
    %v168 = vld [vmem:[#allocation8 + $0x10] sm:$0xff]
    %v169 = vld [vmem:[#allocation8 + $0x18] sm:$0xff]
    %v170 = vld [vmem:[#allocation8 + $0x20] sm:$0xff]
    %v171 = vld [vmem:[#allocation8 + $0x28] sm:$0xff]
    %v172 = vld [vmem:[#allocation8 + $0x30] sm:$0xff]
    %v173 = vld [vmem:[#allocation8 + $0x38] sm:$0xff]
    %v174 = vld [vmem:[#allocation8 + $0x40] sm:$0xff]
    %v175 = vld [vmem:[#allocation8 + $0x48] sm:$0xff]
    %v176 = vld [vmem:[#allocation8 + $0x50] sm:$0xff]
    %v177 = vld [vmem:[#allocation8 + $0x58] sm:$0xff]
    %v178 = vld [vmem:[#allocation8 + $0x60] sm:$0xff]
    %v179 = vld [vmem:[#allocation8 + $0x68] sm:$0xff]
    %v180 = vld [vmem:[#allocation8 + $0x70] sm:$0xff]
    %v181 = vld [vmem:[#allocation8 + $0x78] sm:$0xff]
    %v183 = vperm.slane %v85, 0
    %185 = vmatpush.msra.mxu0 %v181
    %186 = vmatpush.msra.mxu0 %v180
    %187 = vmatpush.msra.mxu0 %v179
    %188 = vmatpush.msra.mxu0 %v178
    %189 = vmatpush.msra.mxu0 %v177
    %190 = vmatpush.msra.mxu0 %v176
    %191 = vmatpush.msra.mxu0 %v175
    %192 = vmatpush.msra.mxu0 %v174
    %193 = vmatpush.msra.mxu0 %v173
    %194 = vmatpush.msra.mxu0 %v172
    %195 = vmatpush.msra.mxu0 %v171
    %196 = vmatpush.msra.mxu0 %v170
    %197 = vmatpush.msra.mxu0 %v169
    %198 = vmatpush.msra.mxu0 %v168
    %199 = vmatpush.msra.mxu0 %v167
    %200 = vmatpush.msra.mxu0 %v166
    %201 = vmatmul.f32.gmra.mxu0 %v165
    %v202 = vpop.f32.mrf.mxu0
    %v203 = vadd.f32 %v183, %v202
    %204 = vdwg.mxu0
    %v205 = vtanh.pop %v203
    %v206 = vmul.f32 %v205, 2.0
    %207 = vst [vmem:[#allocation10] sm:$0xff] %v206
    // Predicated region
    $region38: #{tpu_custom_call.1} parent=1 // pred_check
      _
    $region39: #{tpu_custom_call.1} parent=1 // pred_check_branch
      %209 = sbr.rel (0) target = $region41
    $region40: #{tpu_custom_call.1} parent=1 // pred_region
      %211 = vsyncadd [#allocation4], 0
      %s213 = sshll.u32 [#allocation10], 4
      %s214 = int_to_ptr.vmem [resolvable:$true] %s213
      %s215 = sshll.u32 %s5, 4
      %s216 = int_to_ptr.hbm [resolvable:$true] %s215
      %218 = dma.vmem_to_hbm [thread:$0]  %s214, 128, %s216, [#allocation4]
    $region41: #{tpu_custom_call.1} parent=1 // pred_fallthru
      _
    // Predicated region
    $region42: #{tpu_custom_call.1} parent=1 // pred_check
      _
    $region43: #{tpu_custom_call.1} parent=1 // pred_check_branch
      %220 = sbr.rel (0) target = $region45
    $region44: #{tpu_custom_call.1} parent=1 // pred_region
      %222 = dma.done [#allocation4], 128
    $region45: #{tpu_custom_call.1} parent=1 // pred_fallthru
      _
    %223 = vsyncpa [#allocation3], 1
    %224 = vsyncpa [#allocation6], 1
    %225 = vsyncpa [#allocation9], 1
    %226 = vsyncpa [#allocation4], 1

</llo_original>
